<compile_context>
chip_gen: v6e
topology: v6e:2x2x1
jax: 0.10.0
libtpu: 0.0.40
codegen_flags: <defaults>
</compile_context>

<pallas_src>
import jax
import jax.numpy as jnp
from jax.experimental import pallas as pl
from jax.experimental.pallas import tpu as pltpu

IN_FEATURES = 8
OUT_FEATURES = 1
LANE = 128
SAMPLES_PER_ROW = LANE // IN_FEATURES          # 16 samples per 128-lane row


def _round_up(n, m):
    return ((n + m - 1) // m) * m


def _xla_linear(x, w, b):
    # Exact f32 reference / small-batch fast path: for K=8, N=1 a broadcast
    # multiply + reduce fuses into a single XLA pass and sidesteps the TPU
    # default bf16 matmul precision.
    return jnp.sum(x * w.reshape(1, IN_FEATURES), axis=1, keepdims=True) + b


def linear_kernel(x_ref, w_ref, sel_ref, b_ref, o_ref):
    # x_ref:   (tr, 128)  row-major view of x: 16 samples x 8 features per row
    # w_ref:   (1, 128)   lane-tiled weights: w_ref[0, l] = w[l % 8]
    # sel_ref: (128, 16)  0/1 block selector: sel[l, j] = 1 iff l // 8 == j
    # b_ref:   (1,)       bias scalar in SMEM
    # o_ref:   (tr, 16)   o[r, j] = dot(x[16*r + j, :], w) + b
    prod = x_ref[...] * w_ref[...]                       # exact f32 (VPU)
    # Split into an exactly-bf16-representable part + residual so the 0/1
    # selector matmul stays f32-accurate even if the MXU path truncates f32
    # operands; the extra dot is free under the HBM stall.
    prod_hi = prod.astype(jnp.bfloat16).astype(jnp.float32)
    prod_lo = prod - prod_hi
    acc = jnp.dot(prod_hi, sel_ref[...], preferred_element_type=jnp.float32)
    acc = acc + jnp.dot(prod_lo, sel_ref[...], preferred_element_type=jnp.float32)
    o_ref[...] = (acc + b_ref[0]).astype(o_ref.dtype)


def _pallas_linear(x, w, b, *, block_rows):
    """Single-pass Pallas path. Requires x.shape[0] % 16 == 0 and >= 128."""
    B = x.shape[0]
    R = B // SAMPLES_PER_ROW
    x_rows = x.reshape(R, LANE)        # free: pure row-major reshape, no copy

    lane = jnp.arange(LANE)
    w_row = w.reshape(IN_FEATURES)[lane % IN_FEATURES].reshape(1, LANE)
    w_row = w_row.astype(jnp.float32)
    sel = (lane[:, None] // IN_FEATURES
           == jnp.arange(SAMPLES_PER_ROW)[None, :]).astype(jnp.float32)
    b_vec = b.reshape(OUT_FEATURES).astype(jnp.float32)

    # Balance the tiles: at most one 8-row granule of padding in the last one.
    n_tiles = pl.cdiv(R, block_rows)
    tr = _round_up(pl.cdiv(R, n_tiles), 8)
    grid = (pl.cdiv(R, tr),)

    out = pl.pallas_call(
        linear_kernel,
        out_shape=jax.ShapeDtypeStruct((R, SAMPLES_PER_ROW), x.dtype),
        grid=grid,
        in_specs=[
            # x: streams lane-dense (tr, 128) blocks over the batch rows.
            pl.BlockSpec((tr, LANE), lambda i: (i, 0)),
            # lane-tiled weight row: constant block -> fetched once, resident.
            pl.BlockSpec((1, LANE), lambda i: (0, 0)),
            # 0/1 block selector: constant block -> fetched once, resident.
            pl.BlockSpec((LANE, SAMPLES_PER_ROW), lambda i: (0, 0)),
            # bias: scalar in SMEM (no VMEM tile / per-step broadcast reload).
            pl.BlockSpec(memory_space=pltpu.MemorySpace.SMEM),
        ],
        out_specs=pl.BlockSpec((tr, SAMPLES_PER_ROW), lambda i: (i, 0)),
        compiler_params=pltpu.CompilerParams(
            dimension_semantics=("parallel",),   # v7x: shard stream over 2 TCs
            vmem_limit_bytes=48 * 1024 * 1024,
        ),
        cost_estimate=pl.CostEstimate(
            flops=2 * IN_FEATURES * B,
            transcendentals=0,
            bytes_accessed=4 * (B * IN_FEATURES + B
                                + LANE * (SAMPLES_PER_ROW + 1) + 1),
        ),
    )(x_rows, w_row, sel, b_vec)

    return out.reshape(B, OUT_FEATURES)          # free reshape back to (B, 1)


def net_forward(x, w, b, *, block_rows=8192, min_pallas_batch=4096,
                force_pallas=False):
    """y = x @ w.T + b, same semantics as torch.nn.Linear(8, 1).

    x: (B, 8) f32, w: (1, 8) f32 (torch layout), b: (1,) f32  ->  (B, 1) f32.
    """
    B = x.shape[0]
    if x.dtype != jnp.float32 or (not force_pallas and B < min_pallas_batch):
        # Small/medium B (or non-f32 dtypes): a single fused XLA pass already
        # hits the HBM roofline and avoids the custom-call launch overhead.
        # TODO(synk): lane packing for sub-32-bit dtypes in the Pallas path.
        return _xla_linear(x, w, b)

    # The lane-dense view needs B to be a multiple of 16 (and >= 128 so the
    # row dim covers a full (8, 128) tile).  When it already is -- the common
    # large-batch case -- this is completely copy-free; otherwise pad once.
    b_pad = max(_round_up(B, SAMPLES_PER_ROW), 8 * SAMPLES_PER_ROW)
    if b_pad != B:
        x = jnp.pad(x, ((0, b_pad - B), (0, 0)))
    y = _pallas_linear(x, w, b, block_rows=block_rows)
    return y[:B] if b_pad != B else y


if __name__ == "__main__":
    key = jax.random.PRNGKey(0)
    k_x1, k_x2, k_w, k_b = jax.random.split(key, 4)

    # PyTorch-default-style init for nn.Linear(8, 1): U(-1/sqrt(8), 1/sqrt(8)).
    bound = 1.0 / (IN_FEATURES ** 0.5)
    w = jax.random.uniform(k_w, (OUT_FEATURES, IN_FEATURES),
                           minval=-bound, maxval=bound, dtype=jnp.float32)
    b = jax.random.uniform(k_b, (OUT_FEATURES,),
                           minval=-bound, maxval=bound, dtype=jnp.float32)

    # 1) Tiny batch matching the module spec (batch=2, features=8): the
    #    wrapper auto-dispatches to the fused XLA fast path.
    x_small = jax.random.normal(k_x1, (2, IN_FEATURES), dtype=jnp.float32)
    y_small = net_forward(x_small, w, b)
    jax.block_until_ready(y_small)
    assert y_small.shape == (2, OUT_FEATURES)
    assert jnp.allclose(y_small, _xla_linear(x_small, w, b),
                        atol=1e-5, rtol=1e-5)

    # 2) A batch (still small: 64 KiB of input) that exercises the Pallas
    #    kernel: B=2048 -> a (128, 128) lane-dense view, single grid step.
    B = 2048
    x = jax.random.normal(k_x2, (B, IN_FEATURES), dtype=jnp.float32)
    y = net_forward(x, w, b, force_pallas=True)
    jax.block_until_ready(y)
    y_ref = _xla_linear(x, w, b)
    assert y.shape == (B, OUT_FEATURES)
    assert jnp.allclose(y, y_ref, atol=2e-4, rtol=2e-4)

    print("KERNEL_OK")
</pallas_src>

<mosaic_0001>
module attributes {stable_mosaic.version = 11 : i64} {
  func.func @linear_kernel(%arg0: i32, %arg1: memref<128x128xf32, #tpu.memory_space<vmem>>, %arg2: memref<1x128xf32, #tpu.memory_space<vmem>>, %arg3: memref<128x16xf32, #tpu.memory_space<vmem>>, %arg4: memref<1xf32, #tpu.memory_space<smem>>, %arg5: memref<128x16xf32, #tpu.memory_space<vmem>>) attributes {dimension_semantics = [#tpu.dimension_semantics<parallel>], iteration_bounds = array<i64: 1>, scalar_prefetch = 0 : i64, scratch_operands = 0 : i64, tpu.core_type = #tpu.core_type<tc>, window_params = [{transform_indices = @transform_0, window_bounds = array<i64: 128, 128>}, {pipeline_mode = #tpu.pipeline_mode<synchronous>, transform_indices = @transform_1, window_bounds = array<i64: 1, 128>}, {pipeline_mode = #tpu.pipeline_mode<synchronous>, transform_indices = @transform_2, window_bounds = array<i64: 128, 16>}, {transform_indices = @transform_3, window_bounds = array<i64: 1>}, {transform_indices = @transform_4, window_bounds = array<i64: 128, 16>}]} {
    %c0 = arith.constant 0 : index
    %c0_0 = arith.constant 0 : index
    %0 = vector.load %arg1[%c0, %c0_0] : memref<128x128xf32, #tpu.memory_space<vmem>>, vector<128x128xf32>
    %c0_1 = arith.constant 0 : index
    %c0_2 = arith.constant 0 : index
    %1 = vector.load %arg2[%c0_1, %c0_2] : memref<1x128xf32, #tpu.memory_space<vmem>>, vector<1x128xf32>
    %2 = vector.broadcast %1 : vector<1x128xf32> to vector<128x128xf32>
    %3 = arith.mulf %0, %2 : vector<128x128xf32>
    %4 = arith.truncf %3 : vector<128x128xf32> to vector<128x128xbf16>
    %5 = arith.extf %4 : vector<128x128xbf16> to vector<128x128xf32>
    %6 = arith.subf %3, %5 : vector<128x128xf32>
    %c0_3 = arith.constant 0 : index
    %c0_4 = arith.constant 0 : index
    %7 = vector.load %arg3[%c0_3, %c0_4] : memref<128x16xf32, #tpu.memory_space<vmem>>, vector<128x16xf32>
    %cst = arith.constant dense<0.000000e+00> : vector<128x16xf32>
    %8 = tpu.matmul %5, %7, %cst {dimension_numbers = #tpu.dot_dimension_numbers<[1], [0], [0], [1], [0, 0, 1, 1], [], []>} : vector<128x128xf32>, vector<128x16xf32>, vector<128x16xf32> -> vector<128x16xf32>
    %c0_5 = arith.constant 0 : index
    %c0_6 = arith.constant 0 : index
    %9 = vector.load %arg3[%c0_5, %c0_6] : memref<128x16xf32, #tpu.memory_space<vmem>>, vector<128x16xf32>
    %cst_7 = arith.constant dense<0.000000e+00> : vector<128x16xf32>
    %10 = tpu.matmul %6, %9, %cst_7 {dimension_numbers = #tpu.dot_dimension_numbers<[1], [0], [0], [1], [0, 0, 1, 1], [], []>} : vector<128x128xf32>, vector<128x16xf32>, vector<128x16xf32> -> vector<128x16xf32>
    %11 = arith.addf %8, %10 : vector<128x16xf32>
    %c0_8 = arith.constant 0 : index
    %12 = memref.load %arg4[%c0_8] : memref<1xf32, #tpu.memory_space<smem>>
    %13 = vector.broadcast %12 : f32 to vector<128x16xf32>
    %14 = arith.addf %11, %13 : vector<128x16xf32>
    %c0_9 = arith.constant 0 : index
    %c0_10 = arith.constant 0 : index
    %15 = vector.load %arg5[%c0_9, %c0_10] : memref<128x16xf32, #tpu.memory_space<vmem>>, vector<128x16xf32>
    tpu.vector_store %arg5[%c0_9, %c0_10], %14 {strides = array<i32>} : memref<128x16xf32, #tpu.memory_space<vmem>>, vector<128x16xf32>,
    return
  }
  func.func @transform_0(%arg0: i32) -> (i32, i32) {
    %c0_i32 = arith.constant 0 : i32
    %c0_i32_0 = arith.constant 0 : i32
    return %arg0, %c0_i32 : i32, i32
  }
  func.func @transform_1(%arg0: i32) -> (i32, i32) {
    %c0_i32 = arith.constant 0 : i32
    %c0_i32_0 = arith.constant 0 : i32
    %c0_i32_1 = arith.constant 0 : i32
    return %c0_i32, %c0_i32_0 : i32, i32
  }
  func.func @transform_2(%arg0: i32) -> (i32, i32) {
    %c0_i32 = arith.constant 0 : i32
    %c0_i32_0 = arith.constant 0 : i32
    %c0_i32_1 = arith.constant 0 : i32
    return %c0_i32, %c0_i32_0 : i32, i32
  }
  func.func @transform_3(%arg0: i32) -> i32 {
    %c0_i32 = arith.constant 0 : i32
    %c0_i32_0 = arith.constant 0 : i32
    return %c0_i32 : i32
  }
  func.func @transform_4(%arg0: i32) -> (i32, i32) {
    %c0_i32 = arith.constant 0 : i32
    %c0_i32_0 = arith.constant 0 : i32
    return %arg0, %c0_i32 : i32, i32
  }
}

</mosaic_0001>

<llo_original>
// kernel: tpu_custom_call.1
$region0: #{tpu_custom_call.1}
  #allocation0 [shape = 'u32[]', space=smem, size = 0x4, offset = 0x4, fixed_abs, tag = 'smem constant byte address 0x4 - core index']
  #allocation1 [shape = 'u32[144,128]{1,0:T(1,128)}', space=vmem, size = 0x12000, scoped, tag = 'internal scratch']
  #allocation2 [shape = 'f32[1]{0:T(128)S(6)}', space=smem, size = 0x200, scoped, tag = 'scoped memory for tpu_custom_call.1']
  %s0 = inlined_call_operand.vmem [shape: f32[128,128], index: 0, kind: input, shape index: {}]
  %s1 = inlined_call_operand.vmem [shape: f32[1,128], index: 1, kind: input, shape index: {}]
  %s2 = inlined_call_operand.vmem [shape: f32[128,16], index: 2, kind: input, shape index: {}]
  %s3 = inlined_call_operand.<no memory space> [shape: f32[1], index: 3, kind: input, shape index: {}]
  %s4 = inlined_call_operand.vmem [shape: f32[128,16], index: 4, kind: output, shape index: {}]
  %s5 = sld [smem:[#allocation0]]
  $region26: #{tpu_custom_call.1} parent=0
    _
  %s7 = ssub.s32 1, %s5
  %s8 = scalar_select 0, %s7, %s5
  %9 = sst [smem:[#allocation2]] %s3
  // Predicated region
  $region2: #{tpu_custom_call.1} parent=0 // pred_check
    _
  $region3: #{tpu_custom_call.1} parent=0 // pred_check_branch
    %11 = sbr.rel (0) target = $region5
  $region4: #{tpu_custom_call.1} parent=0 // pred_region
    _
  $region5: #{tpu_custom_call.1} parent=0 // pred_fallthru
    _
  // Predicated region
  $region6: #{tpu_custom_call.1} parent=0 // pred_check
    _
  $region7: #{tpu_custom_call.1} parent=0 // pred_check_branch
    %13 = sbr.rel (0) target = $region9
  $region8: #{tpu_custom_call.1} parent=0 // pred_region
    _
  $region9: #{tpu_custom_call.1} parent=0 // pred_fallthru
    _
  // Predicated region
  $region10: #{tpu_custom_call.1} parent=0 // pred_check
    _
  $region11: #{tpu_custom_call.1} parent=0 // pred_check_branch
    %15 = sbr.rel (0) target = $region13
  $region12: #{tpu_custom_call.1} parent=0 // pred_region
    _
  $region13: #{tpu_custom_call.1} parent=0 // pred_fallthru
    _
  // Predicated region
  $region14: #{tpu_custom_call.1} parent=0 // pred_check
    _
  $region15: #{tpu_custom_call.1} parent=0 // pred_check_branch
    %17 = sbr.rel (0) target = $region17
  $region16: #{tpu_custom_call.1} parent=0 // pred_region
    _
  $region17: #{tpu_custom_call.1} parent=0 // pred_fallthru
    _
  %v18 = vld [vmem:[%s0] sm:$0xff]
  %v19 = vld [vmem:[%s0 + $0x8] sm:$0xff]
  %v20 = vld [vmem:[%s0 + $0x10] sm:$0xff]
  %v21 = vld [vmem:[%s0 + $0x18] sm:$0xff]
  %v22 = vld [vmem:[%s0 + $0x20] sm:$0xff]
  %v23 = vld [vmem:[%s0 + $0x28] sm:$0xff]
  %v24 = vld [vmem:[%s0 + $0x30] sm:$0xff]
  %v25 = vld [vmem:[%s0 + $0x38] sm:$0xff]
  %v26 = vld [vmem:[%s0 + $0x40] sm:$0xff]
  %v27 = vld [vmem:[%s0 + $0x48] sm:$0xff]
  %v28 = vld [vmem:[%s0 + $0x50] sm:$0xff]
  %v29 = vld [vmem:[%s0 + $0x58] sm:$0xff]
  %v30 = vld [vmem:[%s0 + $0x60] sm:$0xff]
  %v31 = vld [vmem:[%s0 + $0x68] sm:$0xff]
  %v32 = vld [vmem:[%s0 + $0x70] sm:$0xff]
  %v33 = vld [vmem:[%s0 + $0x78] sm:$0xff]
  %v34 = vld [vmem:[%s1] sm:$0x1]
  %v36 = vlaneseq
  %v37 = vshrl.u32 %v36, 7
  %v38 = vsub.s32 0, %v37
  %v39 = vrot.slane %v34, %v38
  %v41 = vmul.f32 %v18, %v39
  %v42 = vmul.f32 %v19, %v39
  %v43 = vmul.f32 %v20, %v39
  %v44 = vmul.f32 %v21, %v39
  %v45 = vmul.f32 %v22, %v39
  %v46 = vmul.f32 %v23, %v39
  %v47 = vmul.f32 %v24, %v39
  %v48 = vmul.f32 %v25, %v39
  %v49 = vmul.f32 %v26, %v39
  %v50 = vmul.f32 %v27, %v39
  %v51 = vmul.f32 %v28, %v39
  %v52 = vmul.f32 %v29, %v39
  %v53 = vmul.f32 %v30, %v39
  %v54 = vmul.f32 %v31, %v39
  %v55 = vmul.f32 %v32, %v39
  %v56 = vmul.f32 %v33, %v39
  %v57 = vpack.c.bf16 %v42, %v41
  %v58 = vpack.c.bf16 %v44, %v43
  %v59 = vpack.c.bf16 %v46, %v45
  %v60 = vpack.c.bf16 %v48, %v47
  %v61 = vpack.c.bf16 %v50, %v49
  %v62 = vpack.c.bf16 %v52, %v51
  %v63 = vpack.c.bf16 %v54, %v53
  %v64 = vpack.c.bf16 %v56, %v55
  %v65 = vunpack.c.l.bf16 %v57
  %v66 = vunpack.c.h.bf16 %v57
  %v67 = vunpack.c.l.bf16 %v58
  %v68 = vunpack.c.h.bf16 %v58
  %v69 = vunpack.c.l.bf16 %v59
  %v70 = vunpack.c.h.bf16 %v59
  %v71 = vunpack.c.l.bf16 %v60
  %v72 = vunpack.c.h.bf16 %v60
  %v73 = vunpack.c.l.bf16 %v61
  %v74 = vunpack.c.h.bf16 %v61
  %v75 = vunpack.c.l.bf16 %v62
  %v76 = vunpack.c.h.bf16 %v62
  %v77 = vunpack.c.l.bf16 %v63
  %v78 = vunpack.c.h.bf16 %v63
  %v79 = vunpack.c.l.bf16 %v64
  %v80 = vunpack.c.h.bf16 %v64
  %v81 = vsub.f32 %v41, %v65
  %v82 = vsub.f32 %v42, %v66
  %v83 = vsub.f32 %v43, %v67
  %v84 = vsub.f32 %v44, %v68
  %v85 = vsub.f32 %v45, %v69
  %v86 = vsub.f32 %v46, %v70
  %v87 = vsub.f32 %v47, %v71
  %v88 = vsub.f32 %v48, %v72
  %v89 = vsub.f32 %v49, %v73
  %v90 = vsub.f32 %v50, %v74
  %v91 = vsub.f32 %v51, %v75
  %v92 = vsub.f32 %v52, %v76
  %v93 = vsub.f32 %v53, %v77
  %v94 = vsub.f32 %v54, %v78
  %v95 = vsub.f32 %v55, %v79
  %v96 = vsub.f32 %v56, %v80
  %v97 = vld [vmem:[%s2] sm:$0xff]
  %v98 = vld [vmem:[%s2 + $0x8] sm:$0xff]
  %v99 = vld [vmem:[%s2 + $0x10] sm:$0xff]
  %v100 = vld [vmem:[%s2 + $0x18] sm:$0xff]
  %v101 = vld [vmem:[%s2 + $0x20] sm:$0xff]
  %v102 = vld [vmem:[%s2 + $0x28] sm:$0xff]
  %v103 = vld [vmem:[%s2 + $0x30] sm:$0xff]
  %v104 = vld [vmem:[%s2 + $0x38] sm:$0xff]
  %v105 = vld [vmem:[%s2 + $0x40] sm:$0xff]
  %v106 = vld [vmem:[%s2 + $0x48] sm:$0xff]
  %v107 = vld [vmem:[%s2 + $0x50] sm:$0xff]
  %v108 = vld [vmem:[%s2 + $0x58] sm:$0xff]
  %v109 = vld [vmem:[%s2 + $0x60] sm:$0xff]
  %v110 = vld [vmem:[%s2 + $0x68] sm:$0xff]
  %v111 = vld [vmem:[%s2 + $0x70] sm:$0xff]
  %v112 = vld [vmem:[%s2 + $0x78] sm:$0xff]
  %113 = vmatprep.subr.mxu0 0.0
  %114 = vmatpush1.msra.mxu0 %v112
  %115 = vmatprep.subr.mxu0 0.0
  %116 = vmatpush1.msra.mxu0 %v111
  %117 = vmatprep.subr.mxu0 0.0
  %118 = vmatpush1.msra.mxu0 %v110
  %119 = vmatprep.subr.mxu0 0.0
  %120 = vmatpush1.msra.mxu0 %v109
  %121 = vmatprep.subr.mxu0 0.0
  %122 = vmatpush1.msra.mxu0 %v108
  %123 = vmatprep.subr.mxu0 0.0
  %124 = vmatpush1.msra.mxu0 %v107
  %125 = vmatprep.subr.mxu0 0.0
  %126 = vmatpush1.msra.mxu0 %v106
  %127 = vmatprep.subr.mxu0 0.0
  %128 = vmatpush1.msra.mxu0 %v105
  %129 = vmatprep.subr.mxu0 0.0
  %130 = vmatpush1.msra.mxu0 %v104
  %131 = vmatprep.subr.mxu0 0.0
  %132 = vmatpush1.msra.mxu0 %v103
  %133 = vmatprep.subr.mxu0 0.0
  %134 = vmatpush1.msra.mxu0 %v102
  %135 = vmatprep.subr.mxu0 0.0
  %136 = vmatpush1.msra.mxu0 %v101
  %137 = vmatprep.subr.mxu0 0.0
  %138 = vmatpush1.msra.mxu0 %v100
  %139 = vmatprep.subr.mxu0 0.0
  %140 = vmatpush1.msra.mxu0 %v99
  %141 = vmatprep.subr.mxu0 0.0
  %142 = vmatpush1.msra.mxu0 %v98
  %143 = vmatprep.subr.mxu0 0.0
  %144 = vmatpush1.msra.mxu0 %v97
  %145 = vmatprep.subr.mxu0 0.0
  %146 = vmatpush2.msra.mxu0 0.0
  %147 = vmatprep.subr.mxu0 0.0
  %148 = vmatpush2.msra.mxu0 0.0
  %149 = vmatprep.subr.mxu0 0.0
  %150 = vmatpush2.msra.mxu0 0.0
  %151 = vmatprep.subr.mxu0 0.0
  %152 = vmatpush2.msra.mxu0 0.0
  %153 = vmatprep.subr.mxu0 0.0
  %154 = vmatpush2.msra.mxu0 0.0
  %155 = vmatprep.subr.mxu0 0.0
  %156 = vmatpush2.msra.mxu0 0.0
  %157 = vmatprep.subr.mxu0 0.0
  %158 = vmatpush2.msra.mxu0 0.0
  %159 = vmatprep.subr.mxu0 0.0
  %160 = vmatpush2.msra.mxu0 0.0
  %161 = vmatprep.subr.mxu0 0.0
  %162 = vmatpush2.msra.mxu0 0.0
  %163 = vmatprep.subr.mxu0 0.0
  %164 = vmatpush2.msra.mxu0 0.0
  %165 = vmatprep.subr.mxu0 0.0
  %166 = vmatpush2.msra.mxu0 0.0
  %167 = vmatprep.subr.mxu0 0.0
  %168 = vmatpush2.msra.mxu0 0.0
  %169 = vmatprep.subr.mxu0 0.0
  %170 = vmatpush2.msra.mxu0 0.0
  %171 = vmatprep.subr.mxu0 0.0
  %172 = vmatpush2.msra.mxu0 0.0
  %173 = vmatprep.subr.mxu0 0.0
  %174 = vmatpush2.msra.mxu0 0.0
  %175 = vmatprep.subr.mxu0 0.0
  %176 = vmatpush2.msra.mxu0 0.0
  %177 = vmatprep.mubr.f32.mxu0 0.0
  %178 = vmatmul.mubr.f32.gmra.mxu0 %v81
  %v179 = vpop.f32.mrf.mxu0
  %v180 = vadd.f32 0.0, %v179
  %v181 = vpop.f32.mrf.mxu0
  %182 = vmatprep.mubr.f32.mxu0 0.0
  %183 = vmatmul.mubr.f32.gmra.mxu0 %v82
  %v184 = vpop.f32.mrf.mxu0
  %v185 = vadd.f32 0.0, %v184
  %v186 = vpop.f32.mrf.mxu0
  %187 = vmatprep.mubr.f32.mxu0 0.0
  %188 = vmatmul.mubr.f32.gmra.mxu0 %v83
  %v189 = vpop.f32.mrf.mxu0
  %v190 = vadd.f32 0.0, %v189
  %v191 = vpop.f32.mrf.mxu0
  %192 = vmatprep.mubr.f32.mxu0 0.0
  %193 = vmatmul.mubr.f32.gmra.mxu0 %v84
  %v194 = vpop.f32.mrf.mxu0
  %v195 = vadd.f32 0.0, %v194
  %v196 = vpop.f32.mrf.mxu0
  %197 = vmatprep.mubr.f32.mxu0 0.0
  %198 = vmatmul.mubr.f32.gmra.mxu0 %v85
  %v199 = vpop.f32.mrf.mxu0
  %v200 = vadd.f32 0.0, %v199
  %v201 = vpop.f32.mrf.mxu0
  %202 = vmatprep.mubr.f32.mxu0 0.0
  %203 = vmatmul.mubr.f32.gmra.mxu0 %v86
  %v204 = vpop.f32.mrf.mxu0
  %v205 = vadd.f32 0.0, %v204
  %v206 = vpop.f32.mrf.mxu0
  %207 = vmatprep.mubr.f32.mxu0 0.0
  %208 = vmatmul.mubr.f32.gmra.mxu0 %v87
  %v209 = vpop.f32.mrf.mxu0
  %v210 = vadd.f32 0.0, %v209
  %v211 = vpop.f32.mrf.mxu0
  %212 = vmatprep.mubr.f32.mxu0 0.0
  %213 = vmatmul.mubr.f32.gmra.mxu0 %v88
  %v214 = vpop.f32.mrf.mxu0
  %v215 = vadd.f32 0.0, %v214
  %v216 = vpop.f32.mrf.mxu0
  %217 = vmatprep.mubr.f32.mxu0 0.0
  %218 = vmatmul.mubr.f32.gmra.mxu0 %v89
  %v219 = vpop.f32.mrf.mxu0
  %v220 = vadd.f32 0.0, %v219
  %v221 = vpop.f32.mrf.mxu0
  %222 = vmatprep.mubr.f32.mxu0 0.0
  %223 = vmatmul.mubr.f32.gmra.mxu0 %v90
  %v224 = vpop.f32.mrf.mxu0
  %v225 = vadd.f32 0.0, %v224
  %v226 = vpop.f32.mrf.mxu0
  %227 = vmatprep.mubr.f32.mxu0 0.0
  %228 = vmatmul.mubr.f32.gmra.mxu0 %v91
  %v229 = vpop.f32.mrf.mxu0
  %v230 = vadd.f32 0.0, %v229
  %v231 = vpop.f32.mrf.mxu0
  %232 = vmatprep.mubr.f32.mxu0 0.0
  %233 = vmatmul.mubr.f32.gmra.mxu0 %v92
  %v234 = vpop.f32.mrf.mxu0
  %v235 = vadd.f32 0.0, %v234
  %v236 = vpop.f32.mrf.mxu0
  %237 = vmatprep.mubr.f32.mxu0 0.0
  %238 = vmatmul.mubr.f32.gmra.mxu0 %v93
  %v239 = vpop.f32.mrf.mxu0
  %v240 = vadd.f32 0.0, %v239
  %v241 = vpop.f32.mrf.mxu0
  %242 = vmatprep.mubr.f32.mxu0 0.0
  %243 = vmatmul.mubr.f32.gmra.mxu0 %v94
  %v244 = vpop.f32.mrf.mxu0
  %v245 = vadd.f32 0.0, %v244
  %v246 = vpop.f32.mrf.mxu0
  %247 = vmatprep.mubr.f32.mxu0 0.0
  %248 = vmatmul.mubr.f32.gmra.mxu0 %v95
  %v249 = vpop.f32.mrf.mxu0
  %v250 = vadd.f32 0.0, %v249
  %v251 = vpop.f32.mrf.mxu0
  %252 = vmatprep.mubr.f32.mxu0 0.0
  %253 = vmatmul.mubr.f32.gmra.mxu0 %v96
  %v254 = vpop.f32.mrf.mxu0
  %v255 = vadd.f32 0.0, %v254
  %v256 = vpop.f32.mrf.mxu0
  %257 = vdwg.mxu0
  %258 = vmatprep.subr.mxu0 0.0
  %259 = vmatpush1.msra.mxu0 %v112
  %260 = vmatprep.subr.mxu0 0.0
  %261 = vmatpush1.msra.mxu0 %v111
  %262 = vmatprep.subr.mxu0 0.0
  %263 = vmatpush1.msra.mxu0 %v110
  %264 = vmatprep.subr.mxu0 0.0
  %265 = vmatpush1.msra.mxu0 %v109
  %266 = vmatprep.subr.mxu0 0.0
  %267 = vmatpush1.msra.mxu0 %v108
  %268 = vmatprep.subr.mxu0 0.0
  %269 = vmatpush1.msra.mxu0 %v107
  %270 = vmatprep.subr.mxu0 0.0
  %271 = vmatpush1.msra.mxu0 %v106
  %272 = vmatprep.subr.mxu0 0.0
  %273 = vmatpush1.msra.mxu0 %v105
  %274 = vmatprep.subr.mxu0 0.0
  %275 = vmatpush1.msra.mxu0 %v104
  %276 = vmatprep.subr.mxu0 0.0
  %277 = vmatpush1.msra.mxu0 %v103
  %278 = vmatprep.subr.mxu0 0.0
  %279 = vmatpush1.msra.mxu0 %v102
  %280 = vmatprep.subr.mxu0 0.0
  %281 = vmatpush1.msra.mxu0 %v101
  %282 = vmatprep.subr.mxu0 0.0
  %283 = vmatpush1.msra.mxu0 %v100
  %284 = vmatprep.subr.mxu0 0.0
  %285 = vmatpush1.msra.mxu0 %v99
  %286 = vmatprep.subr.mxu0 0.0
  %287 = vmatpush1.msra.mxu0 %v98
  %288 = vmatprep.subr.mxu0 0.0
  %289 = vmatpush1.msra.mxu0 %v97
  %290 = vmatprep.subr.mxu0 0.0
  %291 = vmatpush2.msra.mxu0 0.0
  %292 = vmatprep.subr.mxu0 0.0
  %293 = vmatpush2.msra.mxu0 0.0
  %294 = vmatprep.subr.mxu0 0.0
  %295 = vmatpush2.msra.mxu0 0.0
  %296 = vmatprep.subr.mxu0 0.0
  %297 = vmatpush2.msra.mxu0 0.0
  %298 = vmatprep.subr.mxu0 0.0
  %299 = vmatpush2.msra.mxu0 0.0
  %300 = vmatprep.subr.mxu0 0.0
  %301 = vmatpush2.msra.mxu0 0.0
  %302 = vmatprep.subr.mxu0 0.0
  %303 = vmatpush2.msra.mxu0 0.0
  %304 = vmatprep.subr.mxu0 0.0
  %305 = vmatpush2.msra.mxu0 0.0
  %306 = vmatprep.subr.mxu0 0.0
  %307 = vmatpush2.msra.mxu0 0.0
  %308 = vmatprep.subr.mxu0 0.0
  %309 = vmatpush2.msra.mxu0 0.0
  %310 = vmatprep.subr.mxu0 0.0
  %311 = vmatpush2.msra.mxu0 0.0
  %312 = vmatprep.subr.mxu0 0.0
  %313 = vmatpush2.msra.mxu0 0.0
  %314 = vmatprep.subr.mxu0 0.0
  %315 = vmatpush2.msra.mxu0 0.0
  %316 = vmatprep.subr.mxu0 0.0
  %317 = vmatpush2.msra.mxu0 0.0
  %318 = vmatprep.subr.mxu0 0.0
  %319 = vmatpush2.msra.mxu0 0.0
  %320 = vmatprep.subr.mxu0 0.0
  %321 = vmatpush2.msra.mxu0 0.0
  %322 = vmatprep.mubr.f32.mxu0 0.0
  %323 = vmatmul.mubr.f32.gmra.mxu0 %v65
  %v324 = vpop.f32.mrf.mxu0
  %v325 = vadd.f32 %v180, %v324
  %v326 = vpop.f32.mrf.mxu0
  %327 = vmatprep.mubr.f32.mxu0 0.0
  %328 = vmatmul.mubr.f32.gmra.mxu0 %v66
  %v329 = vpop.f32.mrf.mxu0
  %v330 = vadd.f32 %v185, %v329
  %v331 = vpop.f32.mrf.mxu0
  %332 = vmatprep.mubr.f32.mxu0 0.0
  %333 = vmatmul.mubr.f32.gmra.mxu0 %v67
  %v334 = vpop.f32.mrf.mxu0
  %v335 = vadd.f32 %v190, %v334
  %v336 = vpop.f32.mrf.mxu0
  %337 = vmatprep.mubr.f32.mxu0 0.0
  %338 = vmatmul.mubr.f32.gmra.mxu0 %v68
  %v339 = vpop.f32.mrf.mxu0
  %v340 = vadd.f32 %v195, %v339
  %v341 = vpop.f32.mrf.mxu0
  %342 = vmatprep.mubr.f32.mxu0 0.0
  %343 = vmatmul.mubr.f32.gmra.mxu0 %v69
  %v344 = vpop.f32.mrf.mxu0
  %v345 = vadd.f32 %v200, %v344
  %v346 = vpop.f32.mrf.mxu0
  %347 = vmatprep.mubr.f32.mxu0 0.0
  %348 = vmatmul.mubr.f32.gmra.mxu0 %v70
  %v349 = vpop.f32.mrf.mxu0
  %v350 = vadd.f32 %v205, %v349
  %v351 = vpop.f32.mrf.mxu0
  %352 = vmatprep.mubr.f32.mxu0 0.0
  %353 = vmatmul.mubr.f32.gmra.mxu0 %v71
  %v354 = vpop.f32.mrf.mxu0
  %v355 = vadd.f32 %v210, %v354
  %v356 = vpop.f32.mrf.mxu0
  %357 = vmatprep.mubr.f32.mxu0 0.0
  %358 = vmatmul.mubr.f32.gmra.mxu0 %v72
  %v359 = vpop.f32.mrf.mxu0
  %v360 = vadd.f32 %v215, %v359
  %v361 = vpop.f32.mrf.mxu0
  %362 = vmatprep.mubr.f32.mxu0 0.0
  %363 = vmatmul.mubr.f32.gmra.mxu0 %v73
  %v364 = vpop.f32.mrf.mxu0
  %v365 = vadd.f32 %v220, %v364
  %v366 = vpop.f32.mrf.mxu0
  %367 = vmatprep.mubr.f32.mxu0 0.0
  %368 = vmatmul.mubr.f32.gmra.mxu0 %v74
  %v369 = vpop.f32.mrf.mxu0
  %v370 = vadd.f32 %v225, %v369
  %v371 = vpop.f32.mrf.mxu0
  %372 = vmatprep.mubr.f32.mxu0 0.0
  %373 = vmatmul.mubr.f32.gmra.mxu0 %v75
  %v374 = vpop.f32.mrf.mxu0
  %v375 = vadd.f32 %v230, %v374
  %v376 = vpop.f32.mrf.mxu0
  %377 = vmatprep.mubr.f32.mxu0 0.0
  %378 = vmatmul.mubr.f32.gmra.mxu0 %v76
  %v379 = vpop.f32.mrf.mxu0
  %v380 = vadd.f32 %v235, %v379
  %v381 = vpop.f32.mrf.mxu0
  %382 = vmatprep.mubr.f32.mxu0 0.0
  %383 = vmatmul.mubr.f32.gmra.mxu0 %v77
  %v384 = vpop.f32.mrf.mxu0
  %v385 = vadd.f32 %v240, %v384
  %v386 = vpop.f32.mrf.mxu0
  %387 = vmatprep.mubr.f32.mxu0 0.0
  %388 = vmatmul.mubr.f32.gmra.mxu0 %v78
  %v389 = vpop.f32.mrf.mxu0
  %v390 = vadd.f32 %v245, %v389
  %v391 = vpop.f32.mrf.mxu0
  %392 = vmatprep.mubr.f32.mxu0 0.0
  %393 = vmatmul.mubr.f32.gmra.mxu0 %v79
  %v394 = vpop.f32.mrf.mxu0
  %v395 = vadd.f32 %v250, %v394
  %v396 = vpop.f32.mrf.mxu0
  %397 = vmatprep.mubr.f32.mxu0 0.0
  %398 = vmatmul.mubr.f32.gmra.mxu0 %v80
  %v399 = vpop.f32.mrf.mxu0
  %v400 = vadd.f32 %v255, %v399
  %v401 = vpop.f32.mrf.mxu0
  %402 = vdwg.mxu0
  %s403 = sld [smem:[#allocation2]]
  %v404 = vstv %s403
  %v405 = vadd.f32 %v325, %v404
  %v406 = vadd.f32 %v330, %v404
  %v407 = vadd.f32 %v335, %v404
  %v408 = vadd.f32 %v340, %v404
  %v409 = vadd.f32 %v345, %v404
  %v410 = vadd.f32 %v350, %v404
  %v411 = vadd.f32 %v355, %v404
  %v412 = vadd.f32 %v360, %v404
  %v413 = vadd.f32 %v365, %v404
  %v414 = vadd.f32 %v370, %v404
  %v415 = vadd.f32 %v375, %v404
  %v416 = vadd.f32 %v380, %v404
  %v417 = vadd.f32 %v385, %v404
  %v418 = vadd.f32 %v390, %v404
  %v419 = vadd.f32 %v395, %v404
  %v420 = vadd.f32 %v400, %v404
  %vm421 = vcmask 130048
  %422 = vst.msk [vmem:[%s4] sm:$0xff] %vm421, %v405
  %423 = vst.msk [vmem:[%s4 + $0x8] sm:$0xff] %vm421, %v406
  %424 = vst.msk [vmem:[%s4 + $0x10] sm:$0xff] %vm421, %v407
  %425 = vst.msk [vmem:[%s4 + $0x18] sm:$0xff] %vm421, %v408
  %426 = vst.msk [vmem:[%s4 + $0x20] sm:$0xff] %vm421, %v409
  %427 = vst.msk [vmem:[%s4 + $0x28] sm:$0xff] %vm421, %v410
  %428 = vst.msk [vmem:[%s4 + $0x30] sm:$0xff] %vm421, %v411
  %429 = vst.msk [vmem:[%s4 + $0x38] sm:$0xff] %vm421, %v412
  %430 = vst.msk [vmem:[%s4 + $0x40] sm:$0xff] %vm421, %v413
  %431 = vst.msk [vmem:[%s4 + $0x48] sm:$0xff] %vm421, %v414
  %432 = vst.msk [vmem:[%s4 + $0x50] sm:$0xff] %vm421, %v415
  %433 = vst.msk [vmem:[%s4 + $0x58] sm:$0xff] %vm421, %v416
  %434 = vst.msk [vmem:[%s4 + $0x60] sm:$0xff] %vm421, %v417
  %435 = vst.msk [vmem:[%s4 + $0x68] sm:$0xff] %vm421, %v418
  %436 = vst.msk [vmem:[%s4 + $0x70] sm:$0xff] %vm421, %v419
  %437 = vst.msk [vmem:[%s4 + $0x78] sm:$0xff] %vm421, %v420
  // Predicated region
  $region18: #{tpu_custom_call.1} parent=0 // pred_check
    _
  $region19: #{tpu_custom_call.1} parent=0 // pred_check_branch
    %439 = sbr.rel (0) target = $region21
  $region20: #{tpu_custom_call.1} parent=0 // pred_region
    _
  $region21: #{tpu_custom_call.1} parent=0 // pred_fallthru
    _
  // Predicated region
  $region22: #{tpu_custom_call.1} parent=0 // pred_check
    _
  $region23: #{tpu_custom_call.1} parent=0 // pred_check_branch
    %441 = sbr.rel (0) target = $region25
  $region24: #{tpu_custom_call.1} parent=0 // pred_region
    _
  $region25: #{tpu_custom_call.1} parent=0 // pred_fallthru
    _

</llo_original>
